<compile_context>
chip_gen: v7x
topology: tpu7x:2x2x1
jax: 0.10.0
libtpu: 0.0.40
codegen_flags: <defaults>
</compile_context>

<pallas_src>
import numpy as np
import jax
import jax.numpy as jnp
from jax.experimental import pallas as pl
from jax.experimental.pallas import tpu as pltpu


def _double_in_single_out_kernel(scale_ref, packed_ref, o_ref):
    # scale_ref : (1, 1) f32 in SMEM
    # packed_ref: (B+5, 4) f32 in VMEM  -> rows [0,B)=xy, [B,B+4)=W, [B+4,B+5)=bias
    # o_ref     : (B, B) f32 in VMEM
    B = o_ref.shape[0]
    K = packed_ref.shape[1]                      # 4 (fused input width == hidden width)

    xy = packed_ref[0:B, :]                      # (B, 4)   [x | y]
    w = packed_ref[B:B + K, :]                   # (4, 4)   [[W1],[W2]]
    b = packed_ref[B + K:B + K + 1, :]           # (1, 4)   b1 + b2

    # Fused linear on the MXU: h = [x|y] @ [[W1],[W2]] + (b1+b2)  -> (B, 4)
    h = jnp.dot(xy, w, preferred_element_type=jnp.float32) + b

    # Gram = h @ h.T in a single dot_general (contraction over feature dim).
    gram = jax.lax.dot_general(
        h, h, (((1,), (1,)), ((), ())), preferred_element_type=jnp.float32
    )

    # Single full-tile store; scalar exp(logit_scale) broadcasts for free.
    o_ref[...] = jnp.exp(scale_ref[0, 0]) - gram


def fuse_params(w1, b1, w2, b2, logit_scale):
    """One-time parameter fusion (call once at init, NOT per forward call).

    w1, w2: (2, 4) f32 (PyTorch Linear weights pre-transposed to
            (in_features, out_features)).  b1, b2: (4,) f32.  logit_scale: scalar.
    Returns (wb, scale) where wb is (5, 4) = [[W1],[W2],[b1+b2]] and scale is (1,1).
    """
    w = jnp.concatenate([w1.astype(jnp.float32), w2.astype(jnp.float32)], axis=0)   # (4, 4)
    b = (b1.astype(jnp.float32) + b2.astype(jnp.float32)).reshape(1, -1)            # (1, 4)
    wb = jnp.concatenate([w, b], axis=0)                                            # (5, 4)
    scale = jnp.asarray(logit_scale, jnp.float32).reshape(1, 1)                     # (1, 1)
    return wb, scale


@jax.jit
def double_in_single_out(x, y, wb, scale):
    """x, y: (B, 2) f32.  wb, scale: from fuse_params().  Returns (B, B) f32."""
    assert x.shape == y.shape, "x and y must have identical shapes"
    B = x.shape[0]

    # Per-call activation prep only: pack [x|y] on top of the pre-fused params
    # so the kernel receives a single tiny VMEM operand.
    xy = jnp.concatenate([x.astype(jnp.float32), y.astype(jnp.float32)], axis=1)    # (B, 4)
    packed = jnp.concatenate([xy, wb], axis=0)                                      # (B+5, 4)

    return pl.pallas_call(
        _double_in_single_out_kernel,
        out_shape=jax.ShapeDtypeStruct((B, B), jnp.float32),
        in_specs=[
            pl.BlockSpec(memory_space=pltpu.MemorySpace.SMEM),   # logit_scale (1,1)
            pl.BlockSpec(memory_space=pltpu.MemorySpace.VMEM),   # packed (B+5, 4)
        ],
        out_specs=pl.BlockSpec(memory_space=pltpu.MemorySpace.VMEM),
    )(scale, packed)


if __name__ == "__main__":
    key = jax.random.PRNGKey(0)
    k_x, k_y, k_w1, k_b1, k_w2, k_b2 = jax.random.split(key, 6)

    B, IN, OUT = 4, 2, 4

    # Inputs matching the module's usage: x, y of shape (4, 2)
    x = jax.random.normal(k_x, (B, IN), jnp.float32)
    y = jax.random.normal(k_y, (B, IN), jnp.float32)

    # Deterministic synthetic parameters (PyTorch-like uniform init bound 1/sqrt(in))
    bound = 1.0 / np.sqrt(IN)
    w1 = jax.random.uniform(k_w1, (IN, OUT), jnp.float32, -bound, bound)  # f1.weight.T
    b1 = jax.random.uniform(k_b1, (OUT,), jnp.float32, -bound, bound)
    w2 = jax.random.uniform(k_w2, (IN, OUT), jnp.float32, -bound, bound)  # f2.weight.T
    b2 = jax.random.uniform(k_b2, (OUT,), jnp.float32, -bound, bound)
    logit_scale = jnp.asarray(np.log(1.0 / 0.07), jnp.float32)

    # One-time parameter fusion (hoisted out of the per-call path).
    wb, scale = fuse_params(w1, b1, w2, b2, logit_scale)

    out = double_in_single_out(x, y, wb, scale)
    out = jax.block_until_ready(out)

    # Pure-JAX reference check
    h_ref = x @ w1 + b1 + y @ w2 + b2
    ref = jnp.exp(logit_scale) - h_ref @ h_ref.T
    np.testing.assert_allclose(np.asarray(out), np.asarray(ref), rtol=1e-5, atol=1e-5)

    print("KERNEL_OK")
</pallas_src>

<mosaic_0001>
module attributes {stable_mosaic.version = 11 : i64} {
  func.func @_double_in_single_out_kernel(%arg0: memref<1x1xf32, #tpu.memory_space<smem>>, %arg1: memref<9x4xf32, #tpu.memory_space<vmem>>, %arg2: memref<4x4xf32, #tpu.memory_space<vmem>>) attributes {dimension_semantics = [], scalar_prefetch = 0 : i64, scratch_operands = 0 : i64, tpu.core_type = #tpu.core_type<tc>} {
    %c0 = arith.constant 0 : index
    %c0_0 = arith.constant 0 : index
    %0 = vector.load %arg1[%c0, %c0_0] : memref<9x4xf32, #tpu.memory_space<vmem>>, vector<4x4xf32>
    %c4 = arith.constant 4 : index
    %c0_1 = arith.constant 0 : index
    %1 = vector.load %arg1[%c4, %c0_1] : memref<9x4xf32, #tpu.memory_space<vmem>>, vector<4x4xf32>
    %c8 = arith.constant 8 : index
    %c0_2 = arith.constant 0 : index
    %2 = vector.load %arg1[%c8, %c0_2] : memref<9x4xf32, #tpu.memory_space<vmem>>, vector<1x4xf32>
    %cst = arith.constant dense<0.000000e+00> : vector<4x4xf32>
    %3 = tpu.matmul %0, %1, %cst {dimension_numbers = #tpu.dot_dimension_numbers<[1], [0], [0], [1], [0, 0, 1, 1], [], []>} : vector<4x4xf32>, vector<4x4xf32>, vector<4x4xf32> -> vector<4x4xf32>
    %4 = vector.broadcast %2 : vector<1x4xf32> to vector<4x4xf32>
    %5 = arith.addf %3, %4 : vector<4x4xf32>
    %cst_3 = arith.constant dense<0.000000e+00> : vector<4x4xf32>
    %6 = tpu.matmul %5, %5, %cst_3 {dimension_numbers = #tpu.dot_dimension_numbers<[1], [1], [0], [0], [0, 0, 1, 0], [], []>} : vector<4x4xf32>, vector<4x4xf32>, vector<4x4xf32> -> vector<4x4xf32>
    %c0_4 = arith.constant 0 : index
    %c0_5 = arith.constant 0 : index
    %7 = memref.load %arg0[%c0_4, %c0_5] : memref<1x1xf32, #tpu.memory_space<smem>>
    %8 = math.exp %7 : f32
    %9 = vector.broadcast %8 : f32 to vector<4x4xf32>
    %10 = arith.subf %9, %6 : vector<4x4xf32>
    %c0_6 = arith.constant 0 : index
    %c0_7 = arith.constant 0 : index
    %11 = vector.load %arg2[%c0_6, %c0_7] : memref<4x4xf32, #tpu.memory_space<vmem>>, vector<4x4xf32>
    tpu.vector_store %arg2[%c0_6, %c0_7], %10 {strides = array<i32>} : memref<4x4xf32, #tpu.memory_space<vmem>>, vector<4x4xf32>,
    return
  }
}

</mosaic_0001>

<llo_original>
// kernel: double_in_single_out.1
$region0: #{double_in_single_out.1}
  #allocation0 [shape = 'u32[]', space=smem, size = 0x4, offset = 0x4, fixed_abs, tag = 'smem constant byte address 0x4 - core index']
  #allocation1 [shape = 'u32[144,128]{1,0:T(1,128)}', space=vmem, size = 0x12000, scoped, tag = 'internal scratch']
  #allocation2 [shape = 'f32[1,1]{1,0:T(1,128)S(6)}', space=smem, size = 0x200, scoped, tag = 'scoped memory for double_in_single_out.1']
  %s0 = inlined_call_operand.<no memory space> [shape: f32[1,1], index: 0, kind: input, shape index: {}]
  %s1 = inlined_call_operand.vmem [shape: f32[9,4], index: 1, kind: input, shape index: {}]
  %s2 = inlined_call_operand.hbm [shape: f32[4,4], index: 2, kind: output, shape index: {}]
  %s3 = sld [smem:[#allocation0]]
  $region18: #{double_in_single_out.1} parent=0
    _
  %s5 = ssub.s32 1, %s3
  %s6 = scalar_select 0, %s5, %s3
  %7 = sst [smem:[#allocation2]] %s0
  $region1: #{double_in_single_out.1} parent=0
    #allocation3 [shape = 'u8[2048]{0}', space=vmem, size = 0x800, scoped, tag = 'output window, operand 0, single buffered']
    #allocation4 [shape = 's32[1]{0}', space=sflag, size = 0x4, scoped, tag = 'scoped memory for double_in_single_out.1']
    %8 = vsyncpa [#allocation4], 0
    // Predicated region
    $region2: #{double_in_single_out.1} parent=1 // pred_check
      _
    $region3: #{double_in_single_out.1} parent=1 // pred_check_branch
      %10 = sbr.rel (0) target = $region5
    $region4: #{double_in_single_out.1} parent=1 // pred_region
      _
    $region5: #{double_in_single_out.1} parent=1 // pred_fallthru
      _
    // Predicated region
    $region6: #{double_in_single_out.1} parent=1 // pred_check
      _
    $region7: #{double_in_single_out.1} parent=1 // pred_check_branch
      %12 = sbr.rel (0) target = $region9
    $region8: #{double_in_single_out.1} parent=1 // pred_region
      _
    $region9: #{double_in_single_out.1} parent=1 // pred_fallthru
      _
    %v13 = vld [vmem:[%s1] sm:$0xf]
    %v14 = vld [vmem:[%s1 + $0x4] sm:$0xf]
    %v15 = vld [vmem:[%s1 + $0x8] sm:$0x1]
    %v16 = vlaneseq
    %v17 = vshrl.u32 %v16, 7
    %v18 = vsub.s32 0, %v17
    %v19 = vrot.slane %v15, %v18
    %vm20 = vcmask 31744
    %v22 = vsel %vm20, %v13, 0
    %vm24 = vcmask 1043456
    %v26 = vsel %vm24, %v14, 0
    %28 = vmatprep.subr.mxu0 0.0
    %29 = vmatpush1.msra.mxu0 %v26
    %30 = vmatprep.subr.mxu0 0.0
    %31 = vmatpush1.msra.mxu0 0.0
    %32 = vmatprep.subr.mxu0 0.0
    %33 = vmatpush1.msra.mxu0 0.0
    %34 = vmatprep.subr.mxu0 0.0
    %35 = vmatpush1.msra.mxu0 0.0
    %36 = vmatprep.subr.mxu0 0.0
    %37 = vmatpush1.msra.mxu0 0.0
    %38 = vmatprep.subr.mxu0 0.0
    %39 = vmatpush1.msra.mxu0 0.0
    %40 = vmatprep.subr.mxu0 0.0
    %41 = vmatpush1.msra.mxu0 0.0
    %42 = vmatprep.subr.mxu0 0.0
    %43 = vmatpush1.msra.mxu0 0.0
    %44 = vmatprep.subr.mxu0 0.0
    %45 = vmatpush1.msra.mxu0 0.0
    %46 = vmatprep.subr.mxu0 0.0
    %47 = vmatpush1.msra.mxu0 0.0
    %48 = vmatprep.subr.mxu0 0.0
    %49 = vmatpush1.msra.mxu0 0.0
    %50 = vmatprep.subr.mxu0 0.0
    %51 = vmatpush1.msra.mxu0 0.0
    %52 = vmatprep.subr.mxu0 0.0
    %53 = vmatpush1.msra.mxu0 0.0
    %54 = vmatprep.subr.mxu0 0.0
    %55 = vmatpush1.msra.mxu0 0.0
    %56 = vmatprep.subr.mxu0 0.0
    %57 = vmatpush1.msra.mxu0 0.0
    %58 = vmatprep.subr.mxu0 0.0
    %59 = vmatpush1.msra.mxu0 0.0
    %60 = vmatprep.subr.mxu0 0.0
    %61 = vmatpush1.msra.mxu0 0.0
    %62 = vmatprep.subr.mxu0 0.0
    %63 = vmatpush1.msra.mxu0 0.0
    %64 = vmatprep.subr.mxu0 0.0
    %65 = vmatpush1.msra.mxu0 0.0
    %66 = vmatprep.subr.mxu0 0.0
    %67 = vmatpush1.msra.mxu0 0.0
    %68 = vmatprep.subr.mxu0 0.0
    %69 = vmatpush1.msra.mxu0 0.0
    %70 = vmatprep.subr.mxu0 0.0
    %71 = vmatpush1.msra.mxu0 0.0
    %72 = vmatprep.subr.mxu0 0.0
    %73 = vmatpush1.msra.mxu0 0.0
    %74 = vmatprep.subr.mxu0 0.0
    %75 = vmatpush1.msra.mxu0 0.0
    %76 = vmatprep.subr.mxu0 0.0
    %77 = vmatpush1.msra.mxu0 0.0
    %78 = vmatprep.subr.mxu0 0.0
    %79 = vmatpush1.msra.mxu0 0.0
    %80 = vmatprep.subr.mxu0 0.0
    %81 = vmatpush1.msra.mxu0 0.0
    %82 = vmatprep.subr.mxu0 0.0
    %83 = vmatpush1.msra.mxu0 0.0
    %84 = vmatprep.subr.mxu0 0.0
    %85 = vmatpush1.msra.mxu0 0.0
    %86 = vmatprep.subr.mxu0 0.0
    %87 = vmatpush1.msra.mxu0 0.0
    %88 = vmatprep.subr.mxu0 0.0
    %89 = vmatpush1.msra.mxu0 0.0
    %90 = vmatprep.subr.mxu0 0.0
    %91 = vmatpush1.msra.mxu0 0.0
    %92 = vmatprep.mubr.f32.mxu0 0.0
    %93 = vmatmul.mubr.f32.gmra.mrb[0].mxu0 %v22
    %v94 = vpop.f32.mrb[0].mxu0
    %v95 = vadd.f32 %v19, %v94
    %v96 = vpop.f32.mrb[0].mxu0
    %97 = vdwg.mxu0
    %v99 = vsel %vm20, %v95, 0
    %101 = vmatprep.subr.mxu0 0.0
    %102 = vmatpush1.xpose.msra.mxu0 %v99
    %103 = vmatprep.subr.mxu0 0.0
    %104 = vmatpush1.xpose.msra.mxu0 0.0
    %105 = vmatprep.subr.mxu0 0.0
    %106 = vmatpush1.xpose.msra.mxu0 0.0
    %107 = vmatprep.subr.mxu0 0.0
    %108 = vmatpush1.xpose.msra.mxu0 0.0
    %109 = vmatprep.subr.mxu0 0.0
    %110 = vmatpush1.xpose.msra.mxu0 0.0
    %111 = vmatprep.subr.mxu0 0.0
    %112 = vmatpush1.xpose.msra.mxu0 0.0
    %113 = vmatprep.subr.mxu0 0.0
    %114 = vmatpush1.xpose.msra.mxu0 0.0
    %115 = vmatprep.subr.mxu0 0.0
    %116 = vmatpush1.xpose.msra.mxu0 0.0
    %117 = vmatprep.subr.mxu0 0.0
    %118 = vmatpush1.xpose.msra.mxu0 0.0
    %119 = vmatprep.subr.mxu0 0.0
    %120 = vmatpush1.xpose.msra.mxu0 0.0
    %121 = vmatprep.subr.mxu0 0.0
    %122 = vmatpush1.xpose.msra.mxu0 0.0
    %123 = vmatprep.subr.mxu0 0.0
    %124 = vmatpush1.xpose.msra.mxu0 0.0
    %125 = vmatprep.subr.mxu0 0.0
    %126 = vmatpush1.xpose.msra.mxu0 0.0
    %127 = vmatprep.subr.mxu0 0.0
    %128 = vmatpush1.xpose.msra.mxu0 0.0
    %129 = vmatprep.subr.mxu0 0.0
    %130 = vmatpush1.xpose.msra.mxu0 0.0
    %131 = vmatprep.subr.mxu0 0.0
    %132 = vmatpush1.xpose.msra.mxu0 0.0
    %133 = vmatprep.subr.mxu0 0.0
    %134 = vmatpush1.xpose.msra.mxu0 0.0
    %135 = vmatprep.subr.mxu0 0.0
    %136 = vmatpush1.xpose.msra.mxu0 0.0
    %137 = vmatprep.subr.mxu0 0.0
    %138 = vmatpush1.xpose.msra.mxu0 0.0
    %139 = vmatprep.subr.mxu0 0.0
    %140 = vmatpush1.xpose.msra.mxu0 0.0
    %141 = vmatprep.subr.mxu0 0.0
    %142 = vmatpush1.xpose.msra.mxu0 0.0
    %143 = vmatprep.subr.mxu0 0.0
    %144 = vmatpush1.xpose.msra.mxu0 0.0
    %145 = vmatprep.subr.mxu0 0.0
    %146 = vmatpush1.xpose.msra.mxu0 0.0
    %147 = vmatprep.subr.mxu0 0.0
    %148 = vmatpush1.xpose.msra.mxu0 0.0
    %149 = vmatprep.subr.mxu0 0.0
    %150 = vmatpush1.xpose.msra.mxu0 0.0
    %151 = vmatprep.subr.mxu0 0.0
    %152 = vmatpush1.xpose.msra.mxu0 0.0
    %153 = vmatprep.subr.mxu0 0.0
    %154 = vmatpush1.xpose.msra.mxu0 0.0
    %155 = vmatprep.subr.mxu0 0.0
    %156 = vmatpush1.xpose.msra.mxu0 0.0
    %157 = vmatprep.subr.mxu0 0.0
    %158 = vmatpush1.xpose.msra.mxu0 0.0
    %159 = vmatprep.subr.mxu0 0.0
    %160 = vmatpush1.xpose.msra.mxu0 0.0
    %161 = vmatprep.subr.mxu0 0.0
    %162 = vmatpush1.xpose.msra.mxu0 0.0
    %163 = vmatprep.subr.mxu0 0.0
    %164 = vmatpush1.xpose.msra.mxu0 0.0
    %165 = vmatprep.mubr.f32.mxu0 0.0
    %166 = vmatmul.mubr.f32.gmra.mrb[0].mxu0 %v99
    %v167 = vpop.f32.mrb[0].mxu0
    %v168 = vadd.f32 0.0, %v167
    %v169 = vpop.f32.mrb[0].mxu0
    %170 = vdwg.mxu0
    %s171 = sld [smem:[#allocation2]]
    %v172 = vstv %s171
    %v173 = vmul.f32 %v172, 1.442695
    %v174 = vpow.pop %v173
    %s175 = vtos %v174
    %v176 = vstv %s175
    %v177 = vsub.f32 %v176, %v168
    %vm178 = vcmask 27648
    %179 = vst.msk [vmem:[#allocation3] sm:$0xf] %vm178, %v177
    // Predicated region
    $region10: #{double_in_single_out.1} parent=1 // pred_check
      _
    $region11: #{double_in_single_out.1} parent=1 // pred_check_branch
      %181 = sbr.rel (0) target = $region13
    $region12: #{double_in_single_out.1} parent=1 // pred_region
      %s183 = ssub.s32 64, 64
      %184 = vsyncadd [#allocation4], %s183
      %s186 = sshll.u32 [#allocation3], 4
      %s187 = int_to_ptr.vmem [resolvable:$true] %s186
      %189 = dma.vmem_to_hbm [thread:$0]  %s187, 64, %s2, [#allocation4]
    $region13: #{double_in_single_out.1} parent=1 // pred_fallthru
      _
    // Predicated region
    $region14: #{double_in_single_out.1} parent=1 // pred_check
      _
    $region15: #{double_in_single_out.1} parent=1 // pred_check_branch
      %191 = sbr.rel (0) target = $region17
    $region16: #{double_in_single_out.1} parent=1 // pred_region
      %192 = dma.done [#allocation4], 64
    $region17: #{double_in_single_out.1} parent=1 // pred_fallthru
      _
    %193 = vsyncpa [#allocation4], 1

</llo_original>
